<compile_context>
chip_gen: v5e
topology: v5e:2x2
jax: 0.10.0
libtpu: 0.0.40
codegen_flags: <defaults>
</compile_context>

<pallas_src>
import jax
import jax.numpy as jnp
from jax.experimental import pallas as pl
from jax.experimental.pallas import tpu as pltpu


def _round_up(v, m):
    return ((v + m - 1) // m) * m


def _curve_linear_kernel(coeffs_ref, x_ref, w_ref, b_ref, o_ref, acc_ref):
    """coeffs_ref: SMEM [num_bends] f32 (scalar prefetch)
       x_ref:      VMEM [tm, tk]              -- coeff-scaled input slab
       w_ref:      VMEM [tk, tn]              -- pre-transposed stacked weights
       b_ref:      VMEM [num_bends, 1, tn]    -- stacked biases
       o_ref:      VMEM [tm, tn]
       acc_ref:    VMEM [tm, tn] f32 scratch accumulator
    """
    k = pl.program_id(2)

    @pl.when(k == 0)
    def _():
        acc_ref[...] = jnp.zeros_like(acc_ref)

    # MXU: no transpose needed, weights are already [K, N] in HBM.
    acc_ref[...] += jnp.dot(x_ref[...], w_ref[...],
                            preferred_element_type=jnp.float32)

    @pl.when(k == pl.num_programs(2) - 1)
    def _():
        num_bends = b_ref.shape[0]
        # Blend the bend biases with the curve coefficients (f32), once, in the epilogue.
        b_t = coeffs_ref[0] * b_ref[0].astype(jnp.float32)            # [1, tn]
        for j in range(1, num_bends):                                  # small static unroll
            b_t = b_t + coeffs_ref[j] * b_ref[j].astype(jnp.float32)
        o_ref[...] = (acc_ref[...] + b_t).astype(o_ref.dtype)


def curve_linear(x, weights, biases, coeffs, *, tm=256, tn=256, tk=512):
    """x: [B, In]; weights: [num_bends, Out, In]; biases: [num_bends, Out];
       coeffs: [num_bends]. Returns [B, Out] (same dtype as x)."""
    B, In = x.shape
    num_bends, Out, In_w = weights.shape
    assert In == In_w and biases.shape == (num_bends, Out) and coeffs.shape == (num_bends,)

    coeffs = coeffs.astype(jnp.float32)

    # Fold the bend-blend of the weights into the matmul K dimension:
    #   X_big[b, j*In + i] = coeffs[j] * x[b, i]
    #   W_kn [j*In + i, o] = weights[j, o, i]
    K = num_bends * In
    x_big = (x[:, None, :] * coeffs[None, :, None].astype(x.dtype)).reshape(B, K)
    w_kn = jnp.transpose(weights, (0, 2, 1)).reshape(K, Out)

    # Tile sizes: sublane multiple of 8 on M, lane multiples of 128 on K and N
    # (lane-dense output). Small shapes shrink the tiles; large shapes get padded up.
    tm = min(tm, _round_up(B, 8))
    tk = min(tk, _round_up(K, 128))
    tn = min(tn, _round_up(Out, 128))
    M_pad, K_pad, N_pad = _round_up(B, tm), _round_up(K, tk), _round_up(Out, tn)

    x_big = jnp.pad(x_big, ((0, M_pad - B), (0, K_pad - K)))
    w_kn = jnp.pad(w_kn, ((0, K_pad - K), (0, N_pad - Out)))
    biases_3d = jnp.pad(biases, ((0, 0), (0, N_pad - Out))).reshape(num_bends, 1, N_pad)

    grid = (M_pad // tm, N_pad // tn, K_pad // tk)

    out_padded = pl.pallas_call(
        _curve_linear_kernel,
        out_shape=jax.ShapeDtypeStruct((M_pad, N_pad), x.dtype),
        grid_spec=pltpu.PrefetchScalarGridSpec(
            num_scalar_prefetch=1,                          # coeffs -> SMEM
            grid=grid,
            in_specs=[
                pl.BlockSpec((tm, tk), lambda m, n, k, c: (m, k)),               # x_big
                pl.BlockSpec((tk, tn), lambda m, n, k, c: (k, n)),               # W_kn
                pl.BlockSpec((num_bends, 1, tn), lambda m, n, k, c: (0, 0, n)),  # biases
            ],
            out_specs=pl.BlockSpec((tm, tn), lambda m, n, k, c: (m, n)),
            scratch_shapes=[pltpu.VMEM((tm, tn), jnp.float32)],
        ),
        compiler_params=pltpu.CompilerParams(
            dimension_semantics=("parallel", "parallel", "arbitrary"),
        ),
    )(coeffs, x_big, w_kn, biases_3d)

    return out_padded[:B, :Out]


if __name__ == "__main__":
    # Module config (small, consistent with Linear(in_features, out_features, fix_points)):
    in_features = 32
    out_features = 16
    fix_points = (True, False, True)           # 3 bends, like a quadratic Bezier curve
    num_bends = len(fix_points)
    batch = 8

    key = jax.random.PRNGKey(0)
    k_x, k_w, k_b = jax.random.split(key, 3)

    # reset_parameters(): uniform(-stdv, stdv) with stdv = 1/sqrt(in_features)
    stdv = 1.0 / (in_features ** 0.5)
    x = jax.random.normal(k_x, (batch, in_features), dtype=jnp.float32)
    weights = jax.random.uniform(
        k_w, (num_bends, out_features, in_features),
        minval=-stdv, maxval=stdv, dtype=jnp.float32)
    biases = jax.random.uniform(
        k_b, (num_bends, out_features),
        minval=-stdv, maxval=stdv, dtype=jnp.float32)

    # Bezier-style curve coefficients at t = 0.3: [(1-t)^2, 2t(1-t), t^2]
    t = 0.3
    coeffs = jnp.array([(1 - t) ** 2, 2 * t * (1 - t), t ** 2], dtype=jnp.float32)

    out = curve_linear(x, weights, biases, coeffs)
    out = jax.block_until_ready(out)

    # Pure-JAX reference (same math as the PyTorch forward with orient=None).
    w_t = jnp.einsum("j,joi->oi", coeffs, weights)
    b_t = jnp.einsum("j,jo->o", coeffs, biases)
    ref = x @ w_t.T + b_t
    assert out.shape == ref.shape, "shape mismatch vs reference"
    assert jnp.allclose(out, ref, atol=1e-5, rtol=1e-5), "mismatch vs reference"

    print("KERNEL_OK")
</pallas_src>

<mosaic_0001>
module attributes {stable_mosaic.version = 11 : i64} {
  func.func @_curve_linear_kernel(%arg0: i32, %arg1: i32, %arg2: i32, %arg3: memref<3xf32, #tpu.memory_space<smem>>, %arg4: memref<8x128xf32, #tpu.memory_space<vmem>>, %arg5: memref<128x128xf32, #tpu.memory_space<vmem>>, %arg6: memref<3x1x128xf32, #tpu.memory_space<vmem>>, %arg7: memref<8x128xf32, #tpu.memory_space<vmem>>, %arg8: memref<8x128xf32, #tpu.memory_space<vmem>>) attributes {dimension_semantics = [#tpu.dimension_semantics<parallel>, #tpu.dimension_semantics<parallel>, #tpu.dimension_semantics<arbitrary>], iteration_bounds = array<i64: 1, 1, 1>, scalar_prefetch = 1 : i64, scratch_operands = 1 : i64, tpu.core_type = #tpu.core_type<tc>, window_params = [{transform_indices = @transform_0, window_bounds = array<i64: 8, 128>}, {transform_indices = @transform_1, window_bounds = array<i64: 128, 128>}, {transform_indices = @transform_2, window_bounds = array<i64: 3, 1, 128>}, {transform_indices = @transform_3, window_bounds = array<i64: 8, 128>}]} {
    %c0_i32 = arith.constant 0 : i32
    %0 = arith.cmpi eq, %arg2, %c0_i32 : i32
    %1 = arith.extui %0 : i1 to i32
    %c0_i32_0 = arith.constant 0 : i32
    %2 = arith.cmpi ne, %1, %c0_i32_0 : i32
    scf.if %2 {
      %cst_10 = arith.constant 0.000000e+00 : f32
      %12 = vector.broadcast %cst_10 : f32 to vector<8x128xf32>
      %c0_11 = arith.constant 0 : index
      %c0_12 = arith.constant 0 : index
      %13 = vector.load %arg8[%c0_11, %c0_12] : memref<8x128xf32, #tpu.memory_space<vmem>>, vector<8x128xf32>
      tpu.vector_store %arg8[%c0_11, %c0_12], %12 {strides = array<i32>} : memref<8x128xf32, #tpu.memory_space<vmem>>, vector<8x128xf32>,
    } else {
    }
    %c0 = arith.constant 0 : index
    %c0_1 = arith.constant 0 : index
    %3 = vector.load %arg8[%c0, %c0_1] : memref<8x128xf32, #tpu.memory_space<vmem>>, vector<8x128xf32>
    %c0_2 = arith.constant 0 : index
    %c0_3 = arith.constant 0 : index
    %4 = vector.load %arg4[%c0_2, %c0_3] : memref<8x128xf32, #tpu.memory_space<vmem>>, vector<8x128xf32>
    %c0_4 = arith.constant 0 : index
    %c0_5 = arith.constant 0 : index
    %5 = vector.load %arg5[%c0_4, %c0_5] : memref<128x128xf32, #tpu.memory_space<vmem>>, vector<128x128xf32>
    %cst = arith.constant dense<0.000000e+00> : vector<8x128xf32>
    %6 = tpu.matmul %4, %5, %cst {dimension_numbers = #tpu.dot_dimension_numbers<[1], [0], [0], [1], [0, 0, 1, 1], [], []>} : vector<8x128xf32>, vector<128x128xf32>, vector<8x128xf32> -> vector<8x128xf32>
    %7 = arith.addf %3, %6 : vector<8x128xf32>
    %c0_6 = arith.constant 0 : index
    %c0_7 = arith.constant 0 : index
    %8 = vector.load %arg8[%c0_6, %c0_7] : memref<8x128xf32, #tpu.memory_space<vmem>>, vector<8x128xf32>
    tpu.vector_store %arg8[%c0_6, %c0_7], %7 {strides = array<i32>} : memref<8x128xf32, #tpu.memory_space<vmem>>, vector<8x128xf32>,
    %c0_i32_8 = arith.constant 0 : i32
    %9 = arith.cmpi eq, %arg2, %c0_i32_8 : i32
    %10 = arith.extui %9 : i1 to i32
    %c0_i32_9 = arith.constant 0 : i32
    %11 = arith.cmpi ne, %10, %c0_i32_9 : i32
    scf.if %11 {
      %c0_10 = arith.constant 0 : index
      %12 = memref.load %arg3[%c0_10] : memref<3xf32, #tpu.memory_space<smem>>
      %c0_11 = arith.constant 0 : index
      %c0_12 = arith.constant 0 : index
      %c0_13 = arith.constant 0 : index
      %13 = vector.load %arg6[%c0_11, %c0_12, %c0_13] : memref<3x1x128xf32, #tpu.memory_space<vmem>>, vector<1x1x128xf32>
      %14 = vector.shape_cast %13 : vector<1x1x128xf32> to vector<1x128xf32>
      %15 = vector.broadcast %12 : f32 to vector<1x128xf32>
      %16 = arith.mulf %15, %14 : vector<1x128xf32>
      %c1 = arith.constant 1 : index
      %17 = memref.load %arg3[%c1] : memref<3xf32, #tpu.memory_space<smem>>
      %c1_14 = arith.constant 1 : index
      %c0_15 = arith.constant 0 : index
      %c0_16 = arith.constant 0 : index
      %18 = vector.load %arg6[%c1_14, %c0_15, %c0_16] : memref<3x1x128xf32, #tpu.memory_space<vmem>>, vector<1x1x128xf32>
      %19 = vector.shape_cast %18 : vector<1x1x128xf32> to vector<1x128xf32>
      %20 = vector.broadcast %17 : f32 to vector<1x128xf32>
      %21 = arith.mulf %20, %19 : vector<1x128xf32>
      %22 = arith.addf %16, %21 : vector<1x128xf32>
      %c2 = arith.constant 2 : index
      %23 = memref.load %arg3[%c2] : memref<3xf32, #tpu.memory_space<smem>>
      %c2_17 = arith.constant 2 : index
      %c0_18 = arith.constant 0 : index
      %c0_19 = arith.constant 0 : index
      %24 = vector.load %arg6[%c2_17, %c0_18, %c0_19] : memref<3x1x128xf32, #tpu.memory_space<vmem>>, vector<1x1x128xf32>
      %25 = vector.shape_cast %24 : vector<1x1x128xf32> to vector<1x128xf32>
      %26 = vector.broadcast %23 : f32 to vector<1x128xf32>
      %27 = arith.mulf %26, %25 : vector<1x128xf32>
      %28 = arith.addf %22, %27 : vector<1x128xf32>
      %c0_20 = arith.constant 0 : index
      %c0_21 = arith.constant 0 : index
      %29 = vector.load %arg8[%c0_20, %c0_21] : memref<8x128xf32, #tpu.memory_space<vmem>>, vector<8x128xf32>
      %30 = vector.broadcast %28 : vector<1x128xf32> to vector<8x128xf32>
      %31 = arith.addf %29, %30 : vector<8x128xf32>
      %c0_22 = arith.constant 0 : index
      %c0_23 = arith.constant 0 : index
      %32 = vector.load %arg7[%c0_22, %c0_23] : memref<8x128xf32, #tpu.memory_space<vmem>>, vector<8x128xf32>
      tpu.vector_store %arg7[%c0_22, %c0_23], %31 {strides = array<i32>} : memref<8x128xf32, #tpu.memory_space<vmem>>, vector<8x128xf32>,
    } else {
    }
    return
  }
  func.func @transform_0(%arg0: i32, %arg1: i32, %arg2: i32, %arg3: memref<3xf32, #tpu.memory_space<smem>>) -> (i32, i32) {
    %c0_i32 = arith.constant 0 : i32
    return %arg0, %arg2 : i32, i32
  }
  func.func @transform_1(%arg0: i32, %arg1: i32, %arg2: i32, %arg3: memref<3xf32, #tpu.memory_space<smem>>) -> (i32, i32) {
    %c0_i32 = arith.constant 0 : i32
    return %arg2, %arg1 : i32, i32
  }
  func.func @transform_2(%arg0: i32, %arg1: i32, %arg2: i32, %arg3: memref<3xf32, #tpu.memory_space<smem>>) -> (i32, i32, i32) {
    %c0_i32 = arith.constant 0 : i32
    %c0_i32_0 = arith.constant 0 : i32
    %c0_i32_1 = arith.constant 0 : i32
    return %c0_i32, %c0_i32_0, %arg1 : i32, i32, i32
  }
  func.func @transform_3(%arg0: i32, %arg1: i32, %arg2: i32, %arg3: memref<3xf32, #tpu.memory_space<smem>>) -> (i32, i32) {
    %c0_i32 = arith.constant 0 : i32
    return %arg0, %arg1 : i32, i32
  }
}

</mosaic_0001>

<llo_original>
// kernel: tpu_custom_call.1
$region0: #{tpu_custom_call.1}
  #allocation0 [shape = 'u32[]', space=smem, size = 0x4, offset = 0x4, fixed_abs, tag = 'smem constant byte address 0x4 - core index']
  #allocation1 [shape = 'u32[72,128]{1,0:T(1,128)}', space=vmem, size = 0x9000, scoped, tag = 'internal scratch']
  #allocation2 [shape = 'f32[8,128]{1,0:T(8,128)}', space=vmem, size = 0x1000, scoped, tag = 'scratch operand']
  #allocation3 [shape = 's32[1]{0}', space=sflag, size = 0x4, scoped, tag = 'scoped memory for tpu_custom_call.1']
  #allocation4 [shape = 'u8[512]{0}', space=smem, size = 0x200, scoped, tag = 'prefetched SMEM operand 0']
  %s0 = inlined_call_operand.hbm [shape: f32[3], index: 0, kind: input, shape index: {}]
  %s1 = inlined_call_operand.hbm [shape: f32[8,128], index: 1, kind: input, shape index: {}]
  %s2 = inlined_call_operand.hbm [shape: f32[128,128], index: 2, kind: input, shape index: {}]
  %s3 = inlined_call_operand.hbm [shape: f32[3,1,128], index: 3, kind: input, shape index: {}]
  %s4 = inlined_call_operand.hbm [shape: f32[8,128], index: 4, kind: output, shape index: {}]
  %s5 = sld [smem:[#allocation0]]
  $region42: #{tpu_custom_call.1} parent=0
    _
  %s7 = ssub.s32 1, %s5
  %s8 = scalar_select 0, %s7, %s5
  %s10 = sshll.u32 %s0, 4
  %s11 = int_to_ptr.hbm [resolvable:$true] %s10
  %13 = dma.hbm_to_smem %s11, 16, [#allocation4], [#allocation3]
  %15 = dma.done [#allocation3], 16
  %16 = sfence
  $region1: #{tpu_custom_call.1} parent=0
    #allocation5 [shape = 'u8[4096]{0}', space=vmem, size = 0x1000, scoped, tag = 'input window, operand 1, single buffered']
    #allocation6 [shape = 's32[1]{0}', space=sflag, size = 0x4, scoped, tag = 'scoped memory for tpu_custom_call.1']
    #allocation7 [shape = 's32[1]{0}', space=sflag, size = 0x4, scoped, tag = 'scoped memory for tpu_custom_call.1']
    #allocation8 [shape = 'u8[65536]{0}', space=vmem, size = 0x10000, scoped, tag = 'input window, operand 2, single buffered']
    #allocation9 [shape = 's32[1]{0}', space=sflag, size = 0x4, scoped, tag = 'scoped memory for tpu_custom_call.1']
    #allocation10 [shape = 'u8[1536]{0}', space=vmem, size = 0x800, scoped, tag = 'input window, operand 3, single buffered']
    #allocation11 [shape = 'u8[4096]{0}', space=vmem, size = 0x1000, scoped, tag = 'output window, operand 0, single buffered']
    %17 = vsyncpa [#allocation6], 0
    %18 = vsyncpa [#allocation9], 0
    %19 = vsyncpa [#allocation7], 0
    // Predicated region
    $region2: #{tpu_custom_call.1} parent=1 // pred_check
      _
    $region3: #{tpu_custom_call.1} parent=1 // pred_check_branch
      %21 = sbr.rel (0) target = $region5
    $region4: #{tpu_custom_call.1} parent=1 // pred_region
      %23 = vsyncadd [#allocation6], 0
      %s25 = sshll.u32 %s1, 4
      %s26 = int_to_ptr.hbm [resolvable:$true] %s25
      %s27 = sshll.u32 [#allocation5], 4
      %s28 = int_to_ptr.vmem [resolvable:$true] %s27
      %30 = dma.hbm_to_vmem [thread:$0]  %s26, 128, %s28, [#allocation6]
    $region5: #{tpu_custom_call.1} parent=1 // pred_fallthru
      _
    // Predicated region
    $region6: #{tpu_custom_call.1} parent=1 // pred_check
      _
    $region7: #{tpu_custom_call.1} parent=1 // pred_check_branch
      %32 = sbr.rel (0) target = $region9
    $region8: #{tpu_custom_call.1} parent=1 // pred_region
      %34 = vsyncadd [#allocation9], 0
      %s35 = sshll.u32 %s2, 4
      %s36 = int_to_ptr.hbm [resolvable:$true] %s35
      %s37 = sshll.u32 [#allocation8], 4
      %s38 = int_to_ptr.vmem [resolvable:$true] %s37
      %43 = dma.hbm_to_vmem [thread:$0]  %s36, 2048, %s38, [#allocation9], 128, 128, 8
    $region9: #{tpu_custom_call.1} parent=1 // pred_fallthru
      _
    // Predicated region
    $region10: #{tpu_custom_call.1} parent=1 // pred_check
      _
    $region11: #{tpu_custom_call.1} parent=1 // pred_check_branch
      %45 = sbr.rel (0) target = $region13
    $region12: #{tpu_custom_call.1} parent=1 // pred_region
      %47 = vsyncadd [#allocation9], 0
      %s48 = sshll.u32 %s3, 4
      %s49 = int_to_ptr.hbm [resolvable:$true] %s48
      %s50 = sshll.u32 [#allocation10], 4
      %s51 = int_to_ptr.vmem [resolvable:$true] %s50
      %56 = dma.hbm_to_vmem [thread:$0]  %s49, 48, %s51, [#allocation9], 16, 16, 1
    $region13: #{tpu_custom_call.1} parent=1 // pred_fallthru
      _
    // Predicated region
    $region14: #{tpu_custom_call.1} parent=1 // pred_check
      _
    $region15: #{tpu_custom_call.1} parent=1 // pred_check_branch
      %58 = sbr.rel (0) target = $region17
    $region16: #{tpu_custom_call.1} parent=1 // pred_region
      %60 = dma.done [#allocation6], 128
    $region17: #{tpu_custom_call.1} parent=1 // pred_fallthru
      _
    // Predicated region
    $region18: #{tpu_custom_call.1} parent=1 // pred_check
      _
    $region19: #{tpu_custom_call.1} parent=1 // pred_check_branch
      %62 = sbr.rel (0) target = $region21
    $region20: #{tpu_custom_call.1} parent=1 // pred_region
      %64 = dma.done [#allocation9], 2048
    $region21: #{tpu_custom_call.1} parent=1 // pred_fallthru
      _
    // Predicated region
    $region22: #{tpu_custom_call.1} parent=1 // pred_check
      _
    $region23: #{tpu_custom_call.1} parent=1 // pred_check_branch
      %66 = sbr.rel (0) target = $region25
    $region24: #{tpu_custom_call.1} parent=1 // pred_region
      %68 = dma.done [#allocation9], 48
    $region25: #{tpu_custom_call.1} parent=1 // pred_fallthru
      _
    %p69 = scmp.eq.s32.totalorder 0, 0
    // Predicated region
    $region26: #{tpu_custom_call.1} parent=1 // pred_check
      %p70 = pneg %p69
    $region27: #{tpu_custom_call.1} parent=1 // pred_check_branch
      %72 = sbr.rel (%p70) target = $region29
    $region28: #{tpu_custom_call.1} parent=1 // pred_region
      %73 = vst [vmem:[#allocation2] sm:$0xff] 0.0
    $region29: #{tpu_custom_call.1} parent=1 // pred_fallthru
      _
    %v74 = vld [vmem:[#allocation2] sm:$0xff]
    %v75 = vld [vmem:[#allocation5] sm:$0xff]
    %v76 = vld [vmem:[#allocation8] sm:$0xff]
    %v77 = vld [vmem:[#allocation8 + $0x8] sm:$0xff]
    %v78 = vld [vmem:[#allocation8 + $0x10] sm:$0xff]
    %v79 = vld [vmem:[#allocation8 + $0x18] sm:$0xff]
    %v80 = vld [vmem:[#allocation8 + $0x20] sm:$0xff]
    %v81 = vld [vmem:[#allocation8 + $0x28] sm:$0xff]
    %v82 = vld [vmem:[#allocation8 + $0x30] sm:$0xff]
    %v83 = vld [vmem:[#allocation8 + $0x38] sm:$0xff]
    %v84 = vld [vmem:[#allocation8 + $0x40] sm:$0xff]
    %v85 = vld [vmem:[#allocation8 + $0x48] sm:$0xff]
    %v86 = vld [vmem:[#allocation8 + $0x50] sm:$0xff]
    %v87 = vld [vmem:[#allocation8 + $0x58] sm:$0xff]
    %v88 = vld [vmem:[#allocation8 + $0x60] sm:$0xff]
    %v89 = vld [vmem:[#allocation8 + $0x68] sm:$0xff]
    %v90 = vld [vmem:[#allocation8 + $0x70] sm:$0xff]
    %v91 = vld [vmem:[#allocation8 + $0x78] sm:$0xff]
    %92 = vmatpush.msra.mxu0 %v91
    %93 = vmatpush.msra.mxu0 %v90
    %94 = vmatpush.msra.mxu0 %v89
    %95 = vmatpush.msra.mxu0 %v88
    %96 = vmatpush.msra.mxu0 %v87
    %97 = vmatpush.msra.mxu0 %v86
    %98 = vmatpush.msra.mxu0 %v85
    %99 = vmatpush.msra.mxu0 %v84
    %100 = vmatpush.msra.mxu0 %v83
    %101 = vmatpush.msra.mxu0 %v82
    %102 = vmatpush.msra.mxu0 %v81
    %103 = vmatpush.msra.mxu0 %v80
    %104 = vmatpush.msra.mxu0 %v79
    %105 = vmatpush.msra.mxu0 %v78
    %106 = vmatpush.msra.mxu0 %v77
    %107 = vmatpush.msra.mxu0 %v76
    %108 = vmatmul.f32.gmra.mxu0 %v75
    %v109 = vpop.f32.mrf.mxu0
    %v110 = vadd.f32 0.0, %v109
    %111 = vdwg.mxu0
    %v112 = vadd.f32 %v74, %v110
    %113 = vst [vmem:[#allocation2] sm:$0xff] %v112
    // Predicated region
    $region30: #{tpu_custom_call.1} parent=1 // pred_check
      %p114 = pneg %p69
    $region31: #{tpu_custom_call.1} parent=1 // pred_check_branch
      %116 = sbr.rel (%p114) target = $region33
    $region32: #{tpu_custom_call.1} parent=1 // pred_region
      %s117 = sld [smem:[#allocation4]]
      %v118 = vld [vmem:[#allocation10] sm:$0x1]
      %v119 = vstv %s117
      %v120 = vmul.f32 %v119, %v118
      %s121 = sld [smem:[#allocation4 + $0x1]]
      %s122 = scalar_lea.vmem [#allocation10], 1
      %v123 = vld [vmem:[%s122] sm:$0x1]
      %v124 = vstv %s121
      %v125 = vmul.f32 %v124, %v123
      %v126 = vadd.f32 %v120, %v125
      %s127 = sld [smem:[#allocation4 + $0x2]]
      %s128 = scalar_lea.vmem [#allocation10], 2
      %v129 = vld [vmem:[%s128] sm:$0x1]
      %v130 = vstv %s127
      %v131 = vmul.f32 %v130, %v129
      %v132 = vadd.f32 %v126, %v131
      %v133 = vld [vmem:[#allocation2] sm:$0xff]
      %v135 = vperm.slane %v132, 0
      %v137 = vadd.f32 %v133, %v135
      %138 = vst [vmem:[#allocation11] sm:$0xff] %v137
    $region33: #{tpu_custom_call.1} parent=1 // pred_fallthru
      _
    // Predicated region
    $region34: #{tpu_custom_call.1} parent=1 // pred_check
      _
    $region35: #{tpu_custom_call.1} parent=1 // pred_check_branch
      %140 = sbr.rel (0) target = $region37
    $region36: #{tpu_custom_call.1} parent=1 // pred_region
      %142 = vsyncadd [#allocation7], 0
      %s144 = sshll.u32 [#allocation11], 4
      %s145 = int_to_ptr.vmem [resolvable:$true] %s144
      %s146 = sshll.u32 %s4, 4
      %s147 = int_to_ptr.hbm [resolvable:$true] %s146
      %149 = dma.vmem_to_hbm [thread:$0]  %s145, 128, %s147, [#allocation7]
    $region37: #{tpu_custom_call.1} parent=1 // pred_fallthru
      _
    // Predicated region
    $region38: #{tpu_custom_call.1} parent=1 // pred_check
      _
    $region39: #{tpu_custom_call.1} parent=1 // pred_check_branch
      %151 = sbr.rel (0) target = $region41
    $region40: #{tpu_custom_call.1} parent=1 // pred_region
      %153 = dma.done [#allocation7], 128
    $region41: #{tpu_custom_call.1} parent=1 // pred_fallthru
      _
    %154 = vsyncpa [#allocation6], 1
    %155 = vsyncpa [#allocation9], 1
    %156 = vsyncpa [#allocation7], 1

</llo_original>
